<compile_context>
chip_gen: v5e
topology: v5e:2x2
jax: 0.10.0
libtpu: 0.0.40
codegen_flags: <defaults>
</compile_context>

<pallas_src>
import functools
import math
from types import SimpleNamespace

import jax
import jax.numpy as jnp
from jax.experimental import pallas as pl
from jax.experimental.pallas import tpu as pltpu


# ----------------------------------------------------------------------------------------
# per-generation VMEM budgets (queried once; conservative fallback if the query fails)
# ----------------------------------------------------------------------------------------
def _query_vmem_bytes():
    try:
        return int(pltpu.get_tpu_info().vmem_capacity_bytes)
    except Exception:
        return 64 * 1024 * 1024          # v7x-sized conservative fallback


_VMEM_CAP = _query_vmem_bytes()
_BIG_VMEM = _VMEM_CAP >= 100 * 1024 * 1024              # v5e / v6e (128 MiB per core)
_VMEM_LIMIT = (96 if _BIG_VMEM else 40) * 1024 * 1024
_SLAB_BUDGET = (8 if _BIG_VMEM else 4) * 1024 * 1024    # per-block conv slab budget
_TM_TARGET = 1024 if _BIG_VMEM else 512                 # row-tile target for linear/MLP
_TM_BYTES = (8 if _BIG_VMEM else 4) * 1024 * 1024       # widest fp32 row-intermediate / tile


def _cparams(*sem):
    return pltpu.CompilerParams(dimension_semantics=sem,
                                vmem_limit_bytes=_VMEM_LIMIT)


def _pick_tm(n, width):
    # big row tiles with a cdiv grid; cap so the widest fp32 per-row intermediate fits budget
    cap = max(8, ((_TM_BYTES // max(width, 1) // 4) // 8) * 8)
    t = min(_TM_TARGET, cap)
    if n >= t:
        return t
    return max(8, ((n + 7) // 8) * 8)


def _pad_rows(x, tm):
    n = x.shape[0]
    rem = (-n) % tm
    if rem == 0:
        return x
    return jnp.pad(x, ((0, rem), (0, 0)))


def _plan_rows(H, Wp, C, halo, itemsize):
    """Largest row tile th dividing H (th % 8 == 0 or th == H, so output BlockSpecs stay
    layout-legal) whose halo'd slab fits the per-block VMEM budget."""
    def slab(th):
        return (th + 2 * halo) * Wp * C * itemsize
    divs = [d for d in range(H, 0, -1) if H % d == 0]
    cand = [d for d in divs if (d % 8 == 0 or d == H)] or [H]
    fit = [d for d in cand if slab(d) <= _SLAB_BUDGET]
    return fit[0] if fit else min(cand)


# ----------------------------------------------------------------------------------------
# in-kernel math helpers
# ----------------------------------------------------------------------------------------
def _erf(x):
    # Abramowitz & Stegun 7.1.26 rational approximation (|err| < 1.5e-7, ~fp32 exact).
    a1, a2, a3, a4, a5 = 0.254829592, -0.284496736, 1.421413741, -1.453152027, 1.061405429
    p = 0.3275911
    ax = jnp.abs(x)
    t = 1.0 / (1.0 + p * ax)
    poly = ((((a5 * t + a4) * t + a3) * t + a2) * t + a1) * t
    y = 1.0 - poly * jnp.exp(-ax * ax)
    return jnp.where(x < 0, -y, y)


def _gelu(x):
    return 0.5 * x * (1.0 + _erf(x * 0.7071067811865476))


def _sigmoid(x):
    return 1.0 / (1.0 + jnp.exp(-x))


def _layernorm(x, w, b, eps=1e-5):
    mu = jnp.mean(x, axis=-1, keepdims=True)
    var = jnp.mean(jnp.square(x - mu), axis=-1, keepdims=True)
    return (x - mu) * jax.lax.rsqrt(var + eps) * w + b


def _bf16_dot(a, w_bf16):
    return jnp.dot(a.astype(jnp.bfloat16), w_bf16, preferred_element_type=jnp.float32)


# ----------------------------------------------------------------------------------------
# row-tiled MLP / linear kernels
# ----------------------------------------------------------------------------------------
def _mlp_core(x, lnw, lnb, w1, b1, w2, b2):
    xn = _layernorm(x.astype(jnp.float32), lnw, lnb)
    h = _bf16_dot(xn, w1) + b1
    h = _gelu(h)
    return _bf16_dot(h, w2) + b2


def _mlp_kernel(x_ref, lnw_ref, lnb_ref, w1_ref, b1_ref, w2_ref, b2_ref, o_ref):
    y = _mlp_core(x_ref[...], lnw_ref[...], lnb_ref[...],
                  w1_ref[...], b1_ref[...], w2_ref[...], b2_ref[...])
    o_ref[...] = y.astype(o_ref.dtype)


def _mlp_res_kernel(x_ref, res_ref, gamma_ref, lnw_ref, lnb_ref, w1_ref, b1_ref,
                    w2_ref, b2_ref, o_ref):
    y = _mlp_core(x_ref[...], lnw_ref[...], lnb_ref[...],
                  w1_ref[...], b1_ref[...], w2_ref[...], b2_ref[...])
    o_ref[...] = (res_ref[...] + gamma_ref[...] * y).astype(o_ref.dtype)


def _ln_linear_kernel(x_ref, lnw_ref, lnb_ref, w_ref, o_ref):
    xn = _layernorm(x_ref[...].astype(jnp.float32), lnw_ref[...], lnb_ref[...])
    o_ref[...] = _bf16_dot(xn, w_ref[...]).astype(o_ref.dtype)


def _linear_kernel(x_ref, w_ref, b_ref, o_ref):
    o_ref[...] = (_bf16_dot(x_ref[...], w_ref[...]) + b_ref[...]).astype(o_ref.dtype)


def _linear_res_kernel(x_ref, res_ref, gamma_ref, w_ref, b_ref, o_ref):
    y = _bf16_dot(x_ref[...], w_ref[...]) + b_ref[...]
    o_ref[...] = (res_ref[...] + gamma_ref[...] * y).astype(o_ref.dtype)


def mlp_pallas(x, p, residual=None, gamma=None, out_dtype=jnp.float32):
    n0, din = x.shape
    hdim = p["fc1"]["w"].shape[1]
    dout = p["fc2"]["w"].shape[1]
    tm = _pick_tm(n0, max(din, hdim, dout))
    x_p = _pad_rows(x, tm)
    npad = x_p.shape[0]
    w1 = p["fc1"]["w"].astype(jnp.bfloat16)
    w2 = p["fc2"]["w"].astype(jnp.bfloat16)
    tail_specs = [
        pl.BlockSpec((1, din), lambda i: (0, 0)),
        pl.BlockSpec((1, din), lambda i: (0, 0)),
        pl.BlockSpec((din, hdim), lambda i: (0, 0)),
        pl.BlockSpec((1, hdim), lambda i: (0, 0)),
        pl.BlockSpec((hdim, dout), lambda i: (0, 0)),
        pl.BlockSpec((1, dout), lambda i: (0, 0)),
    ]
    tail_args = (p["ln"]["w"][None], p["ln"]["b"][None], w1, p["fc1"]["b"][None],
                 w2, p["fc2"]["b"][None])
    if residual is None:
        kern = _mlp_kernel
        specs = [pl.BlockSpec((tm, din), lambda i: (i, 0))] + tail_specs
        args = (x_p,) + tail_args
    else:
        res_p = _pad_rows(residual, tm)
        kern = _mlp_res_kernel
        specs = [pl.BlockSpec((tm, din), lambda i: (i, 0)),
                 pl.BlockSpec((tm, dout), lambda i: (i, 0)),
                 pl.BlockSpec((1, dout), lambda i: (0, 0))] + tail_specs
        args = (x_p, res_p, gamma[None]) + tail_args
    out = pl.pallas_call(
        kern,
        out_shape=jax.ShapeDtypeStruct((npad, dout), out_dtype),
        grid=(npad // tm,),
        in_specs=specs,
        out_specs=pl.BlockSpec((tm, dout), lambda i: (i, 0)),
        compiler_params=_cparams("parallel"),
    )(*args)
    return out if npad == n0 else out[:n0]


def ln_linear_pallas(x, lnw, lnb, w, out_dtype=jnp.bfloat16):
    n0, din = x.shape
    dout = w.shape[1]
    tm = _pick_tm(n0, max(din, dout))
    x_p = _pad_rows(x, tm)
    npad = x_p.shape[0]
    out = pl.pallas_call(
        _ln_linear_kernel,
        out_shape=jax.ShapeDtypeStruct((npad, dout), out_dtype),
        grid=(npad // tm,),
        in_specs=[pl.BlockSpec((tm, din), lambda i: (i, 0)),
                  pl.BlockSpec((1, din), lambda i: (0, 0)),
                  pl.BlockSpec((1, din), lambda i: (0, 0)),
                  pl.BlockSpec((din, dout), lambda i: (0, 0))],
        out_specs=pl.BlockSpec((tm, dout), lambda i: (i, 0)),
        compiler_params=_cparams("parallel"),
    )(x_p, lnw[None], lnb[None], w.astype(jnp.bfloat16))
    return out if npad == n0 else out[:n0]


def linear_pallas(x, w, b, residual=None, gamma=None, out_dtype=jnp.float32):
    n0, din = x.shape
    dout = w.shape[1]
    tm = _pick_tm(n0, max(din, dout))
    x_p = _pad_rows(x, tm)
    npad = x_p.shape[0]
    wb = w.astype(jnp.bfloat16)
    if residual is None:
        kern = _linear_kernel
        specs = [pl.BlockSpec((tm, din), lambda i: (i, 0)),
                 pl.BlockSpec((din, dout), lambda i: (0, 0)),
                 pl.BlockSpec((1, dout), lambda i: (0, 0))]
        args = (x_p, wb, b[None])
    else:
        res_p = _pad_rows(residual, tm)
        kern = _linear_res_kernel
        specs = [pl.BlockSpec((tm, din), lambda i: (i, 0)),
                 pl.BlockSpec((tm, dout), lambda i: (i, 0)),
                 pl.BlockSpec((1, dout), lambda i: (0, 0)),
                 pl.BlockSpec((din, dout), lambda i: (0, 0)),
                 pl.BlockSpec((1, dout), lambda i: (0, 0))]
        args = (x_p, res_p, gamma[None], wb, b[None])
    out = pl.pallas_call(
        kern,
        out_shape=jax.ShapeDtypeStruct((npad, dout), out_dtype),
        grid=(npad // tm,),
        in_specs=specs,
        out_specs=pl.BlockSpec((tm, dout), lambda i: (i, 0)),
        compiler_params=_cparams("parallel"),
    )(*args)
    return out if npad == n0 else out[:n0]


# ----------------------------------------------------------------------------------------
# flash attention (no XLA head transposes / kv split; pos add + scale folded in-kernel)
# ----------------------------------------------------------------------------------------
def _flash_attn_kernel(q_ref, pos_ref, kv_ref, o_ref, m_sc, l_sc, acc_sc, *, heads, hd, scale):
    D = heads * hd
    ki = pl.program_id(2)

    @pl.when(ki == 0)
    def _():
        m_sc[...] = jnp.full(m_sc.shape, -jnp.inf, jnp.float32)
        l_sc[...] = jnp.zeros(l_sc.shape, jnp.float32)
        acc_sc[...] = jnp.zeros(acc_sc.shape, jnp.float32)

    q_all = (q_ref[...].astype(jnp.float32) + pos_ref[...].astype(jnp.float32)) * scale
    q_all = q_all.astype(jnp.bfloat16)                      # (tq, D), scale folded in
    kv = kv_ref[...]                                        # (tk, 2D)

    for h in range(heads):                                  # static unroll over heads
        qh = q_all[:, h * hd:(h + 1) * hd]
        kh = kv[:, h * hd:(h + 1) * hd].astype(jnp.bfloat16)
        vh = kv[:, D + h * hd:D + (h + 1) * hd].astype(jnp.bfloat16)
        s = jax.lax.dot_general(qh, kh, (((1,), (1,)), ((), ())),
                                preferred_element_type=jnp.float32)        # (tq, tk)
        m_prev = m_sc[h]
        m_new = jnp.maximum(m_prev, jnp.max(s, axis=-1, keepdims=True))
        alpha = jnp.exp(m_prev - m_new)
        p = jnp.exp(s - m_new)
        l_sc[h] = alpha * l_sc[h] + jnp.sum(p, axis=-1, keepdims=True)
        acc_sc[h] = alpha * acc_sc[h] + jnp.dot(p.astype(jnp.bfloat16), vh,
                                                preferred_element_type=jnp.float32)
        m_sc[h] = m_new

    @pl.when(ki == pl.num_programs(2) - 1)
    def _():
        outs = [acc_sc[h] * pl.reciprocal(l_sc[h]) for h in range(heads)]
        o_ref[...] = jnp.concatenate(outs, axis=-1).astype(o_ref.dtype)


def _attn_tiles(n):
    def pick(target):
        if n <= target:
            return n
        for t in (target, target // 2, target // 4, 128, 64, 32, 16, 8):
            if t <= n and n % t == 0:
                return t
        return n              # TODO(synk): pad + mask for ragged sequence lengths
    tq = pick(1024 if _BIG_VMEM else 512)
    tk = pick(512 if _BIG_VMEM else 256)
    return tq, tk


def attention_pallas(q, pos, kv, heads):
    # q: (B,N,D) bf16; pos: (B,N,D) f32; kv: (B,N,2D) bf16 (k then v on the channel axis)
    # TODO(synk): NystromBlock uses landmark attention; exact SDPA implemented here.
    B, N, D = q.shape
    hd = D // heads
    tq, tk = _attn_tiles(N)
    kern = functools.partial(_flash_attn_kernel, heads=heads, hd=hd,
                             scale=1.0 / math.sqrt(hd))
    return pl.pallas_call(
        kern,
        out_shape=jax.ShapeDtypeStruct((B, N, D), jnp.bfloat16),
        grid=(B, N // tq, N // tk),
        in_specs=[pl.BlockSpec((None, tq, D), lambda b, qi, ki: (b, qi, 0)),
                  pl.BlockSpec((None, tq, D), lambda b, qi, ki: (b, qi, 0)),
                  pl.BlockSpec((None, tk, 2 * D), lambda b, qi, ki: (b, ki, 0))],
        out_specs=pl.BlockSpec((None, tq, D), lambda b, qi, ki: (b, qi, 0)),
        scratch_shapes=[pltpu.VMEM((heads, tq, 1), jnp.float32),
                        pltpu.VMEM((heads, tq, 1), jnp.float32),
                        pltpu.VMEM((heads, tq, hd), jnp.float32)],
        compiler_params=_cparams("parallel", "parallel", "arbitrary"),
    )(q, pos, kv)


# ----------------------------------------------------------------------------------------
# convolution kernels (manual halo DMA from HBM; no XLA staging copies)
# ----------------------------------------------------------------------------------------
def _dwconv7_kernel(x_hbm, w_ref, b_ref, o_ref, xbuf, sem, *, th, W, halo):
    bi = pl.program_id(0)
    ri = pl.program_id(1)
    # TODO(synk): double-buffer this DMA (prefetch the next row tile) to hide it behind compute.
    cp = pltpu.make_async_copy(x_hbm.at[bi, pl.ds(ri * th, th + 2 * halo)], xbuf, sem)
    cp.start()
    cp.wait()
    xp = xbuf[...].astype(jnp.float32)                 # (th+6, W+6, C)
    w = w_ref[...]                                     # (49, C)
    c = xp.shape[-1]
    K = 2 * halo + 1
    acc = jnp.zeros((th, W, c), jnp.float32)
    for kw in range(K):                                # 7 unaligned W-shifts (not 49)
        col = xp[:, kw:kw + W, :]
        for kh in range(K):                            # cheap leading-dim offsets
            acc = acc + col[kh:kh + th] * w[kh * K + kw]
    o_ref[...] = (acc + b_ref[0]).astype(o_ref.dtype)


def _im2col_matmul(xp, w_ref, b_ref, th, W, wide_k):
    # xp: (th+2, W+2, Cin); returns (th*W, Cout) fp32
    cin = xp.shape[-1]
    cols = [xp[:, kw:kw + W, :] for kw in range(3)]    # 3 W-shifted slabs, reused per kh
    if wide_k:
        taps = []
        for kh in range(3):
            for kw in range(3):
                taps.append(cols[kw][kh:kh + th].reshape(th * W, cin))
        patches = jnp.concatenate(taps, axis=-1).astype(jnp.bfloat16)      # (th*W, 9*Cin)
        y = jnp.dot(patches, w_ref[...], preferred_element_type=jnp.float32)
    else:
        w = w_ref[...]                                 # (9*Cin, Cout)
        y = None
        t = 0
        for kh in range(3):
            for kw in range(3):
                tap = cols[kw][kh:kh + th].reshape(th * W, cin).astype(jnp.bfloat16)
                part = jnp.dot(tap, w[t * cin:(t + 1) * cin],
                               preferred_element_type=jnp.float32)
                y = part if y is None else y + part
                t += 1
    return y + b_ref[...]


def _conv3x3_kernel(x_hbm, w_ref, b_ref, o_ref, xbuf, sem, *, th, W, wide_k):
    bi = pl.program_id(0)
    ri = pl.program_id(1)
    cp = pltpu.make_async_copy(x_hbm.at[bi, pl.ds(ri * th, th + 2)], xbuf, sem)
    cp.start()
    cp.wait()
    y = _im2col_matmul(xbuf[...], w_ref, b_ref, th, W, wide_k)             # (th*W, Cout)
    cout = y.shape[-1]
    o_ref[...] = y.reshape(th, W, cout).astype(o_ref.dtype)


def _out2_gauss_kernel(x_hbm, w_ref, b_ref, *rest, th, W, wide_k, splits, scale_lambda):
    n_out = len(splits)
    out_refs = rest[:n_out]
    xbuf, sem = rest[n_out], rest[n_out + 1]
    bi = pl.program_id(0)
    ri = pl.program_id(1)
    cp = pltpu.make_async_copy(x_hbm.at[bi, pl.ds(ri * th, th + 2)], xbuf, sem)
    cp.start()
    cp.wait()
    y = _im2col_matmul(xbuf[...], w_ref, b_ref, th, W, wide_k)             # (th*W, Ctot)
    yt = y.T                                                               # (Ctot, th*W)
    bnds, s = [], 0
    for c in splits:
        bnds.append((s, s + c))
        s += c
    pieces = [yt[a:b2] for (a, b2) in bnds]
    # splits = [offset, opacity, scaling, rotation, feat_dc, (feat_rest)]
    off = pieces[0]
    opa = _sigmoid(pieces[1])
    sca = jnp.exp(pieces[2]) * scale_lambda
    rotv = pieces[3]
    rnorm = jnp.sqrt(jnp.sum(rotv * rotv, axis=0, keepdims=True))
    rot = rotv / jnp.maximum(rnorm, 1e-12)
    outs = [off, opa, sca, rot, pieces[4]] + list(pieces[5:])
    for ref, val, (a, b2) in zip(out_refs, outs, bnds):
        c = b2 - a
        ref[...] = val.reshape(c, th, W).astype(ref.dtype)


def dwconv7x7_pallas(x, w, b):
    # x: (B,H,W,C), w: (7,7,C), b: (C,) -- padding='same', groups=C
    B, H, W, C = x.shape
    xp = jnp.pad(x, ((0, 0), (3, 3), (3, 3), (0, 0)))
    th = _plan_rows(H, W + 6, C, 3, x.dtype.itemsize)
    n_rt = H // th
    kern = functools.partial(_dwconv7_kernel, th=th, W=W, halo=3)
    return pl.pallas_call(
        kern,
        out_shape=jax.ShapeDtypeStruct((B, H, W, C), jnp.float32),
        grid=(B, n_rt),
        in_specs=[pl.BlockSpec(memory_space=pl.ANY),
                  pl.BlockSpec((49, C), lambda bi, ri: (0, 0)),
                  pl.BlockSpec((1, C), lambda bi, ri: (0, 0))],
        out_specs=pl.BlockSpec((None, th, W, C), lambda bi, ri: (bi, ri, 0, 0)),
        scratch_shapes=[pltpu.VMEM((th + 6, W + 6, C), x.dtype),
                        pltpu.SemaphoreType.DMA],
        compiler_params=_cparams("parallel", "parallel"),
    )(xp, w.reshape(49, C), b[None])


def conv3x3_pallas(x, w, b, out_dtype=jnp.float32):
    # x: (B,H,W,Cin), w: (3,3,Cin,Cout), b: (Cout,) -- padding=1
    B, H, W, Cin = x.shape
    Cout = w.shape[-1]
    xp = jnp.pad(x, ((0, 0), (1, 1), (1, 1), (0, 0)))
    th = _plan_rows(H, W + 2, Cin, 1, x.dtype.itemsize)
    n_rt = H // th
    wide_k = Cin < 128
    wb = w.reshape(9 * Cin, Cout).astype(jnp.bfloat16)
    kern = functools.partial(_conv3x3_kernel, th=th, W=W, wide_k=wide_k)
    return pl.pallas_call(
        kern,
        out_shape=jax.ShapeDtypeStruct((B, H, W, Cout), out_dtype),
        grid=(B, n_rt),
        in_specs=[pl.BlockSpec(memory_space=pl.ANY),
                  pl.BlockSpec((9 * Cin, Cout), lambda bi, ri: (0, 0)),
                  pl.BlockSpec((1, Cout), lambda bi, ri: (0, 0))],
        out_specs=pl.BlockSpec((None, th, W, Cout), lambda bi, ri: (bi, ri, 0, 0)),
        scratch_shapes=[pltpu.VMEM((th + 2, W + 2, Cin), x.dtype),
                        pltpu.SemaphoreType.DMA],
        compiler_params=_cparams("parallel", "parallel"),
    )(xp, wb, b[None])


def out2_gauss_pallas(x, w, b, splits, scale_lambda):
    # fused out2 conv3x3 + gaussian activations; each split is emitted directly as NCHW.
    B, H, W, Cin = x.shape
    Ctot = w.shape[-1]
    xp = jnp.pad(x, ((0, 0), (1, 1), (1, 1), (0, 0)))
    th = _plan_rows(H, W + 2, Cin, 1, x.dtype.itemsize)
    n_rt = H // th
    wide_k = Cin < 128
    wb = w.reshape(9 * Cin, Ctot).astype(jnp.bfloat16)
    kern = functools.partial(_out2_gauss_kernel, th=th, W=W, wide_k=wide_k,
                             splits=tuple(splits), scale_lambda=scale_lambda)
    out_shapes = tuple(jax.ShapeDtypeStruct((B, c, H, W), jnp.float32) for c in splits)
    out_specs = tuple(pl.BlockSpec((None, c, th, W), lambda bi, ri: (bi, 0, ri, 0))
                      for c in splits)
    return pl.pallas_call(
        kern,
        out_shape=out_shapes,
        grid=(B, n_rt),
        in_specs=[pl.BlockSpec(memory_space=pl.ANY),
                  pl.BlockSpec((9 * Cin, Ctot), lambda bi, ri: (0, 0)),
                  pl.BlockSpec((1, Ctot), lambda bi, ri: (0, 0))],
        out_specs=out_specs,
        scratch_shapes=[pltpu.VMEM((th + 2, W + 2, Cin), x.dtype),
                        pltpu.SemaphoreType.DMA],
        compiler_params=_cparams("parallel", "parallel"),
    )(xp, wb, b[None])


# ----------------------------------------------------------------------------------------
# plain-JAX glue (interpolation, spherical harmonics, normalize)
# ----------------------------------------------------------------------------------------
def _l2norm(x, axis=-1, eps=1e-12):
    n = jnp.sqrt(jnp.sum(x * x, axis=axis, keepdims=True))
    return x / jnp.maximum(n, eps)


def flat_interpolate(flat, old, new):
    # TODO(synk): torch F.interpolate(mode='bilinear', antialias=True) matched with
    # jax.image.resize 'linear' (same triangle-kernel resampling; tiny numeric diffs possible).
    if tuple(old) == tuple(new):
        return flat
    b, _, c = flat.shape
    x = flat.reshape(b, old[0], old[1], c)
    y = jax.image.resize(x, (b, new[0], new[1], c), method="linear", antialias=True)
    return y.reshape(b, new[0] * new[1], c)


def upsample2x_align_corners(x):
    # nn.UpsamplingBilinear2d(scale_factor=2) == bilinear, align_corners=True
    # TODO(synk): fuse this fixed 2x stencil into the following conv3x3 halo read.
    dtype = x.dtype

    def interp_axis(arr, axis, n_in):
        n_out = 2 * n_in
        if n_in == 1:
            return jnp.repeat(arr, 2, axis=axis)
        pos = jnp.arange(n_out) * (n_in - 1) / (n_out - 1)
        i0 = jnp.floor(pos).astype(jnp.int32)
        i1 = jnp.minimum(i0 + 1, n_in - 1)
        frac = (pos - i0).astype(jnp.float32)
        a0 = jnp.take(arr, i0, axis=axis).astype(jnp.float32)
        a1 = jnp.take(arr, i1, axis=axis).astype(jnp.float32)
        shape = [1] * arr.ndim
        shape[axis] = n_out
        frac = frac.reshape(shape)
        return a0 * (1.0 - frac) + a1 * frac

    _, hh, ww, _ = x.shape
    y = interp_axis(x, 1, hh)
    y = interp_axis(y, 2, ww)
    return y.astype(dtype)


def rsh_cart_8(xyz):
    """Real spherical harmonics up to degree 8 (81 channels), evaluated on unit vectors."""
    x, y, z = xyz[..., 0], xyz[..., 1], xyz[..., 2]
    L = 8
    C = [jnp.ones_like(x)]
    S = [jnp.zeros_like(x)]
    for m in range(1, L + 1):
        C.append(x * C[m - 1] - y * S[m - 1])
        S.append(x * S[m - 1] + y * C[m - 1])
    Pb = [[None] * (L + 1) for _ in range(L + 1)]
    Pb[0][0] = jnp.ones_like(z)
    for m in range(1, L + 1):
        Pb[m][m] = -(2 * m - 1) * Pb[m - 1][m - 1]
    for m in range(0, L):
        Pb[m + 1][m] = (2 * m + 1) * z * Pb[m][m]
    for m in range(0, L + 1):
        for l in range(m + 2, L + 1):
            Pb[l][m] = ((2 * l - 1) * z * Pb[l - 1][m] - (l + m - 1) * Pb[l - 2][m]) / (l - m)
    out = []
    for l in range(L + 1):
        for m in range(-l, l + 1):
            am = abs(m)
            K = math.sqrt((2 * l + 1) / (4.0 * math.pi)
                          * math.factorial(l - am) / math.factorial(l + am))
            if m == 0:
                out.append(K * Pb[l][0])
            elif m > 0:
                out.append(math.sqrt(2.0) * K * C[am] * Pb[l][am])
            else:
                out.append(math.sqrt(2.0) * K * S[am] * Pb[l][am])
    return jnp.stack(out, axis=-1)


# ----------------------------------------------------------------------------------------
# parameter initialization (deterministic, synthetic)
# ----------------------------------------------------------------------------------------
def _uniform(key, shape, bound):
    return jax.random.uniform(key, shape, jnp.float32, -bound, bound)


def init_ln(d):
    return {"w": jnp.ones((d,), jnp.float32), "b": jnp.zeros((d,), jnp.float32)}


def init_linear(key, din, dout, bias=True):
    kw, kb = jax.random.split(key)
    bound = 1.0 / math.sqrt(din)
    return {"w": _uniform(kw, (din, dout), bound),
            "b": _uniform(kb, (dout,), bound) if bias else jnp.zeros((dout,), jnp.float32)}


def init_mlp(key, din, dout, expansion):
    hid = int(din * expansion)
    k1, k2 = jax.random.split(key)
    return {"ln": init_ln(din), "fc1": init_linear(k1, din, hid), "fc2": init_linear(k2, hid, dout)}


def init_cvnxt(key, d, expansion, layer_scale, ksize=7):
    k1, k2, k3, k4 = jax.random.split(key, 4)
    bound = 1.0 / math.sqrt(ksize * ksize)
    return {"dw_w": _uniform(k1, (ksize, ksize, d), bound),
            "dw_b": _uniform(k2, (d,), bound),
            "ln": init_ln(d),
            "fc1": init_linear(k3, d, expansion * d),
            "fc2": init_linear(k4, expansion * d, d),
            "gamma": layer_scale * jnp.ones((d,), jnp.float32)}


def init_conv_upsample(key, d, expansion, layer_scale):
    k1, k2, k3, k4, k5 = jax.random.split(key, 5)
    b3 = 1.0 / math.sqrt((d // 2) * 9)
    return {"blocks": [init_cvnxt(k1, d, expansion, layer_scale),
                       init_cvnxt(k2, d, expansion, layer_scale)],
            "conv1": init_linear(k3, d, d // 2),
            "conv3_w": _uniform(k4, (3, 3, d // 2, d // 2), b3),
            "conv3_b": _uniform(k5, (d // 2,), b3)}


def init_attn_block(key, d, heads, expansion, layer_scale):
    k1, k2, k3, k4 = jax.random.split(key, 4)
    return {"heads": heads,
            "norm_x": init_ln(d),
            "norm_ctx": init_ln(d),
            "q": init_linear(k1, d, d, bias=False),
            "kv": init_linear(k2, d, 2 * d, bias=False),
            "out": init_linear(k3, d, d),
            "ls1": layer_scale * jnp.ones((d,), jnp.float32),
            "ls2": layer_scale * jnp.ones((d,), jnp.float32),
            "mlp": init_mlp(k4, d, d, expansion)}


def get_splits_and_inits(cfg):
    split_dimensions = [1, 3, 1, 3, 4, 3]
    scale_inits = [cfg.model.depth_scale, cfg.model.xyz_scale, cfg.model.opacity_scale,
                   cfg.model.scale_scale, 1.0, 5.0]
    bias_inits = [cfg.model.depth_bias, cfg.model.xyz_bias, cfg.model.opacity_bias,
                  cfg.model.scale_bias, 0.0, 0.0]
    if cfg.model.max_sh_degree != 0:
        sh_num_rgb = ((cfg.model.max_sh_degree + 1) ** 2 - 1) * 3
        split_dimensions.append(sh_num_rgb)
        scale_inits.append(cfg.model.sh_scale)
        bias_inits.append(0.0)
    return split_dimensions, scale_inits, bias_inits


def init_gauss_splat_head(key, cfg, hidden_dim, num_heads=8, expansion=4, depths=4,
                          camera_dim=81, layer_scale=1.0):
    # camera_dim = 81 because the MLPs consume rsh_cart_8(rays) (degree-8 real SH basis).
    if isinstance(depths, int):
        depths = [depths] * 3
    assert len(depths) == 3
    nk = iter(jax.random.split(key, 32 + 2 * (depths[1] + depths[2])))
    params = {
        "project_rays16": init_mlp(next(nk), camera_dim, hidden_dim, expansion),
        "project_rays8": init_mlp(next(nk), camera_dim, hidden_dim // 2, expansion),
        "project_rays4": init_mlp(next(nk), camera_dim, hidden_dim // 4, expansion),
        "up8": init_conv_upsample(next(nk), hidden_dim, expansion, layer_scale),
        "up4": init_conv_upsample(next(nk), hidden_dim // 2, expansion, layer_scale),
        "up2": init_conv_upsample(next(nk), hidden_dim // 4, expansion, layer_scale),
        "layers_8": [init_attn_block(next(nk), hidden_dim // 2, num_heads // 2, expansion, layer_scale)
                     for _ in range(depths[1])],
        "layers_4": [init_attn_block(next(nk), hidden_dim // 4, num_heads // 4, expansion, layer_scale)
                     for _ in range(depths[2])],
    }
    split_dimensions, scales, biases = get_splits_and_inits(cfg)
    start = 1
    split_dimensions, scales, biases = split_dimensions[start:], scales[start:], biases[start:]
    cin = hidden_dim // 8
    w_parts, b_parts = [], []
    for oc, s, bb in zip(split_dimensions, scales, biases):
        bound = s * math.sqrt(6.0 / (cin * 9 + oc * 9))   # xavier_uniform_ with gain s per split
        w_parts.append(_uniform(next(nk), (3, 3, cin, oc), bound))
        b_parts.append(jnp.full((oc,), bb, jnp.float32))
    params["out2_w"] = jnp.concatenate(w_parts, axis=-1)
    params["out2_b"] = jnp.concatenate(b_parts)
    params["split_dimensions"] = tuple(split_dimensions)
    return params


# ----------------------------------------------------------------------------------------
# module forward (orchestrating the Pallas kernels)
# ----------------------------------------------------------------------------------------
def mlp_apply(x, p, residual=None, gamma=None):
    lead = x.shape[:-1]
    x2 = x.reshape(-1, x.shape[-1])
    res2 = None if residual is None else residual.reshape(-1, residual.shape[-1])
    y = mlp_pallas(x2, p, residual=res2, gamma=gamma)
    return y.reshape(lead + (y.shape[-1],))


def cvnxt_apply(x, p):
    B, H, W, C = x.shape
    y = dwconv7x7_pallas(x, p["dw_w"], p["dw_b"])
    rows = B * H * W
    out = mlp_pallas(y.reshape(rows, C),
                     {"ln": p["ln"], "fc1": p["fc1"], "fc2": p["fc2"]},
                     residual=x.reshape(rows, C), gamma=p["gamma"])   # x + gamma * MLP(dwconv)
    return out.reshape(B, H, W, C)


def conv_upsample_apply(x, p, out_dtype=jnp.float32):
    for blk in p["blocks"]:
        x = cvnxt_apply(x, blk)
    B, H, W, C = x.shape
    x = linear_pallas(x.reshape(-1, C), p["conv1"]["w"], p["conv1"]["b"],
                      out_dtype=jnp.bfloat16).reshape(B, H, W, C // 2)
    x = upsample2x_align_corners(x)                 # bf16 in/out, interp math in fp32
    x = conv3x3_pallas(x, p["conv3_w"], p["conv3_b"], out_dtype=out_dtype)
    B, H2, W2, C2 = x.shape
    return x.reshape(B, H2 * W2, C2)               # "b c h w -> b (h w) c"


def attn_block_apply(x, pos_embed, p):
    B, N, D = x.shape
    heads = p["heads"]
    rows = x.reshape(B * N, D)
    q = ln_linear_pallas(rows, p["norm_x"]["w"], p["norm_x"]["b"], p["q"]["w"],
                         out_dtype=jnp.bfloat16)
    kv = ln_linear_pallas(rows, p["norm_ctx"]["w"], p["norm_ctx"]["b"], p["kv"]["w"],
                          out_dtype=jnp.bfloat16)
    o = attention_pallas(q.reshape(B, N, D), pos_embed, kv.reshape(B, N, 2 * D), heads)
    x1 = linear_pallas(o.reshape(B * N, D), p["out"]["w"], p["out"]["b"],
                       residual=rows, gamma=p["ls1"]).reshape(B, N, D)     # x + ls1*proj(attn)
    x2 = mlp_apply(x1, p["mlp"], residual=x1, gamma=p["ls2"])              # x + ls2*MLP(x)
    return x2


def gauss_splat_head_forward(params, latents_16, rays_hr, shapes, original_shapes, cfg):
    h, w = shapes
    b = latents_16.shape[0]

    re16 = _l2norm(flat_interpolate(rays_hr, original_shapes, (h, w)))
    re8 = _l2norm(flat_interpolate(rays_hr, original_shapes, (h * 2, w * 2)))
    re4 = _l2norm(flat_interpolate(rays_hr, original_shapes, (h * 4, w * 4)))
    re16 = mlp_apply(rsh_cart_8(re16), params["project_rays16"])
    re8 = mlp_apply(rsh_cart_8(re8), params["project_rays8"])
    re4 = mlp_apply(rsh_cart_8(re4), params["project_rays4"])

    x = (latents_16 + re16).reshape(b, h, w, -1)        # 'b (h w) c -> b h w c' (NHWC)
    latents_8 = conv_upsample_apply(x, params["up8"], out_dtype=jnp.float32)
    for lp in params["layers_8"]:
        latents_8 = attn_block_apply(latents_8, re8, lp)

    x = (latents_8 + re8).reshape(b, h * 2, w * 2, -1)
    latents_4 = conv_upsample_apply(x, params["up4"], out_dtype=jnp.float32)
    for lp in params["layers_4"]:
        latents_4 = attn_block_apply(latents_4, re4, lp)

    x = (latents_4 + re4).reshape(b, h * 4, w * 4, -1)
    latents_2 = conv_upsample_apply(x, params["up2"], out_dtype=jnp.bfloat16)

    hh, ww = h * 8, w * 8
    x2 = latents_2.reshape(b, hh, ww, -1)
    splits = params["split_dimensions"]
    # fused out2 conv + gaussian activations; each split emitted directly as NCHW
    pieces = out2_gauss_pallas(x2, params["out2_w"], params["out2_b"], splits,
                               cfg.model.scale_lambda)
    offset, opacity, scaling, rotation, feat_dc = pieces[:5]
    out = {
        ("gauss_opacity", 0): opacity,
        ("gauss_scaling", 0): scaling,
        ("gauss_rotation", 0): rotation,
        ("gauss_features_dc", 0): feat_dc,
    }
    if cfg.model.max_sh_degree > 0:
        out[("gauss_features_rest", 0)] = pieces[5]
    if cfg.model.predict_offset:
        out[("gauss_offset", 0)] = offset
    return out


# ----------------------------------------------------------------------------------------
# main
# ----------------------------------------------------------------------------------------
if __name__ == "__main__":
    cfg = SimpleNamespace(model=SimpleNamespace(
        scale_lambda=0.01, max_sh_degree=1, predict_offset=True,
        depth_scale=1.0, xyz_scale=0.01, opacity_scale=0.05, scale_scale=0.05,
        depth_bias=0.0, xyz_bias=0.0, opacity_bias=-2.0, scale_bias=-4.0, sh_scale=1.0))

    hidden_dim = 32
    num_heads = 8
    shapes = (2, 4)              # latent grid (h, w) at 1/16 resolution -> 8 tokens
    original_shapes = (16, 32)   # full-resolution ray map -> 512 rays
    batch = 2

    root = jax.random.PRNGKey(0)
    kp, kl, kr = jax.random.split(root, 3)
    params = init_gauss_splat_head(kp, cfg, hidden_dim, num_heads=num_heads, expansion=4,
                                   depths=1, camera_dim=81, layer_scale=1.0)

    latents_16 = jax.random.normal(kl, (batch, shapes[0] * shapes[1], hidden_dim), jnp.float32)
    rays_hr = jax.random.normal(kr, (batch, original_shapes[0] * original_shapes[1], 3), jnp.float32)

    out = gauss_splat_head_forward(params, latents_16, rays_hr, shapes, original_shapes, cfg)
    out = jax.block_until_ready(out)

    assert out[("gauss_rotation", 0)].shape == (batch, 4, shapes[0] * 8, shapes[1] * 8)
    assert out[("gauss_features_rest", 0)].shape == (batch, 9, shapes[0] * 8, shapes[1] * 8)
    assert out[("gauss_opacity", 0)].shape == (batch, 1, shapes[0] * 8, shapes[1] * 8)
    print("KERNEL_OK")
</pallas_src>

<mosaic_0001>
module attributes {stable_mosaic.version = 11 : i64} {
  func.func @_mlp_kernel(%arg0: i32, %arg1: memref<16x81xf32, #tpu.memory_space<vmem>>, %arg2: memref<1x81xf32, #tpu.memory_space<vmem>>, %arg3: memref<1x81xf32, #tpu.memory_space<vmem>>, %arg4: memref<81x324xbf16, #tpu.memory_space<vmem>>, %arg5: memref<1x324xf32, #tpu.memory_space<vmem>>, %arg6: memref<324x32xbf16, #tpu.memory_space<vmem>>, %arg7: memref<1x32xf32, #tpu.memory_space<vmem>>, %arg8: memref<16x32xf32, #tpu.memory_space<vmem>>) attributes {dimension_semantics = [#tpu.dimension_semantics<parallel>], iteration_bounds = array<i64: 1>, scalar_prefetch = 0 : i64, scratch_operands = 0 : i64, tpu.core_type = #tpu.core_type<tc>, window_params = [{transform_indices = @transform_0, window_bounds = array<i64: 16, 81>}, {pipeline_mode = #tpu.pipeline_mode<synchronous>, transform_indices = @transform_1, window_bounds = array<i64: 1, 81>}, {pipeline_mode = #tpu.pipeline_mode<synchronous>, transform_indices = @transform_2, window_bounds = array<i64: 1, 81>}, {pipeline_mode = #tpu.pipeline_mode<synchronous>, transform_indices = @transform_3, window_bounds = array<i64: 81, 324>}, {pipeline_mode = #tpu.pipeline_mode<synchronous>, transform_indices = @transform_4, window_bounds = array<i64: 1, 324>}, {pipeline_mode = #tpu.pipeline_mode<synchronous>, transform_indices = @transform_5, window_bounds = array<i64: 324, 32>}, {pipeline_mode = #tpu.pipeline_mode<synchronous>, transform_indices = @transform_6, window_bounds = array<i64: 1, 32>}, {transform_indices = @transform_7, window_bounds = array<i64: 16, 32>}]} {
    %c0 = arith.constant 0 : index
    %c0_0 = arith.constant 0 : index
    %0 = vector.load %arg1[%c0, %c0_0] : memref<16x81xf32, #tpu.memory_space<vmem>>, vector<16x81xf32>
    %c0_1 = arith.constant 0 : index
    %c0_2 = arith.constant 0 : index
    %1 = vector.load %arg2[%c0_1, %c0_2] : memref<1x81xf32, #tpu.memory_space<vmem>>, vector<1x81xf32>
    %c0_3 = arith.constant 0 : index
    %c0_4 = arith.constant 0 : index
    %2 = vector.load %arg3[%c0_3, %c0_4] : memref<1x81xf32, #tpu.memory_space<vmem>>, vector<1x81xf32>
    %c0_5 = arith.constant 0 : index
    %c0_6 = arith.constant 0 : index
    %3 = vector.load %arg4[%c0_5, %c0_6] : memref<81x324xbf16, #tpu.memory_space<vmem>>, vector<81x324xbf16>
    %c0_7 = arith.constant 0 : index
    %c0_8 = arith.constant 0 : index
    %4 = vector.load %arg5[%c0_7, %c0_8] : memref<1x324xf32, #tpu.memory_space<vmem>>, vector<1x324xf32>
    %c0_9 = arith.constant 0 : index
    %c0_10 = arith.constant 0 : index
    %5 = vector.load %arg6[%c0_9, %c0_10] : memref<324x32xbf16, #tpu.memory_space<vmem>>, vector<324x32xbf16>
    %c0_11 = arith.constant 0 : index
    %c0_12 = arith.constant 0 : index
    %6 = vector.load %arg7[%c0_11, %c0_12] : memref<1x32xf32, #tpu.memory_space<vmem>>, vector<1x32xf32>
    %cst = arith.constant dense<0.000000e+00> : vector<16xf32>
    %7 = vector.multi_reduction <add>, %0, %cst [1] : vector<16x81xf32> to vector<16xf32>
    %8 = vector.shape_cast %7 : vector<16xf32> to vector<16x1xf32>
    %cst_13 = arith.constant 8.100000e+01 : f32
    %9 = vector.broadcast %cst_13 : f32 to vector<16x1xf32>
    %10 = arith.divf %8, %9 : vector<16x1xf32>
    %11 = vector.broadcast %10 : vector<16x1xf32> to vector<16x81xf32>
    %12 = arith.subf %0, %11 : vector<16x81xf32>
    %13 = arith.mulf %12, %12 : vector<16x81xf32>
    %cst_14 = arith.constant dense<0.000000e+00> : vector<16xf32>
    %14 = vector.multi_reduction <add>, %13, %cst_14 [1] : vector<16x81xf32> to vector<16xf32>
    %15 = vector.shape_cast %14 : vector<16xf32> to vector<16x1xf32>
    %cst_15 = arith.constant 8.100000e+01 : f32
    %16 = vector.broadcast %cst_15 : f32 to vector<16x1xf32>
    %17 = arith.divf %15, %16 : vector<16x1xf32>
    %18 = vector.broadcast %10 : vector<16x1xf32> to vector<16x81xf32>
    %19 = arith.subf %0, %18 : vector<16x81xf32>
    %cst_16 = arith.constant 9.99999974E-6 : f32
    %20 = vector.broadcast %cst_16 : f32 to vector<16x1xf32>
    %21 = arith.addf %17, %20 : vector<16x1xf32>
    %22 = math.rsqrt %21 : vector<16x1xf32>
    %23 = vector.broadcast %22 : vector<16x1xf32> to vector<16x81xf32>
    %24 = arith.mulf %19, %23 : vector<16x81xf32>
    %25 = vector.broadcast %1 : vector<1x81xf32> to vector<16x81xf32>
    %26 = arith.mulf %24, %25 : vector<16x81xf32>
    %27 = vector.broadcast %2 : vector<1x81xf32> to vector<16x81xf32>
    %28 = arith.addf %26, %27 : vector<16x81xf32>
    %29 = arith.truncf %28 : vector<16x81xf32> to vector<16x81xbf16>
    %cst_17 = arith.constant dense<0.000000e+00> : vector<16x324xf32>
    %30 = tpu.matmul %29, %3, %cst_17 {dimension_numbers = #tpu.dot_dimension_numbers<[1], [0], [0], [1], [0, 0, 1, 1], [], []>} : vector<16x81xbf16>, vector<81x324xbf16>, vector<16x324xf32> -> vector<16x324xf32>
    %31 = vector.broadcast %4 : vector<1x324xf32> to vector<16x324xf32>
    %32 = arith.addf %30, %31 : vector<16x324xf32>
    %cst_18 = arith.constant 5.000000e-01 : f32
    %33 = vector.broadcast %cst_18 : f32 to vector<16x324xf32>
    %34 = arith.mulf %33, %32 : vector<16x324xf32>
    %cst_19 = arith.constant 0.707106769 : f32
    %35 = vector.broadcast %cst_19 : f32 to vector<16x324xf32>
    %36 = arith.mulf %32, %35 : vector<16x324xf32>
    %37 = math.absf %36 : vector<16x324xf32>
    %cst_20 = arith.constant 0.327591091 : f32
    %38 = vector.broadcast %cst_20 : f32 to vector<16x324xf32>
    %39 = arith.mulf %38, %37 : vector<16x324xf32>
    %cst_21 = arith.constant 1.000000e+00 : f32
    %40 = vector.broadcast %cst_21 : f32 to vector<16x324xf32>
    %41 = arith.addf %40, %39 : vector<16x324xf32>
    %cst_22 = arith.constant 1.000000e+00 : f32
    %42 = vector.broadcast %cst_22 : f32 to vector<16x324xf32>
    %43 = arith.divf %42, %41 : vector<16x324xf32>
    %cst_23 = arith.constant 1.06140542 : f32
    %44 = vector.broadcast %cst_23 : f32 to vector<16x324xf32>
    %45 = arith.mulf %44, %43 : vector<16x324xf32>
    %cst_24 = arith.constant -1.45315206 : f32
    %46 = vector.broadcast %cst_24 : f32 to vector<16x324xf32>
    %47 = arith.addf %45, %46 : vector<16x324xf32>
    %48 = arith.mulf %47, %43 : vector<16x324xf32>
    %cst_25 = arith.constant 1.42141378 : f32
    %49 = vector.broadcast %cst_25 : f32 to vector<16x324xf32>
    %50 = arith.addf %48, %49 : vector<16x324xf32>
    %51 = arith.mulf %50, %43 : vector<16x324xf32>
    %cst_26 = arith.constant -0.284496725 : f32
    %52 = vector.broadcast %cst_26 : f32 to vector<16x324xf32>
    %53 = arith.addf %51, %52 : vector<16x324xf32>
    %54 = arith.mulf %53, %43 : vector<16x324xf32>
    %cst_27 = arith.constant 0.254829586 : f32
    %55 = vector.broadcast %cst_27 : f32 to vector<16x324xf32>
    %56 = arith.addf %54, %55 : vector<16x324xf32>
    %57 = arith.mulf %56, %43 : vector<16x324xf32>
    %cst_28 = arith.constant 0.000000e+00 : f32
    %58 = vector.broadcast %cst_28 : f32 to vector<16x324xf32>
    %59 = arith.subf %58, %37 : vector<16x324xf32>
    %60 = arith.mulf %59, %37 : vector<16x324xf32>
    %61 = math.exp %60 : vector<16x324xf32>
    %62 = arith.mulf %57, %61 : vector<16x324xf32>
    %cst_29 = arith.constant 1.000000e+00 : f32
    %63 = vector.broadcast %cst_29 : f32 to vector<16x324xf32>
    %64 = arith.subf %63, %62 : vector<16x324xf32>
    %cst_30 = arith.constant 0.000000e+00 : f32
    %65 = vector.broadcast %cst_30 : f32 to vector<16x324xf32>
    %66 = arith.cmpf olt, %36, %65 : vector<16x324xf32>
    %cst_31 = arith.constant 0.000000e+00 : f32
    %67 = vector.broadcast %cst_31 : f32 to vector<16x324xf32>
    %68 = arith.subf %67, %64 : vector<16x324xf32>
    %69 = arith.select %66, %68, %64 : vector<16x324xi1>, vector<16x324xf32>
    %cst_32 = arith.constant 1.000000e+00 : f32
    %70 = vector.broadcast %cst_32 : f32 to vector<16x324xf32>
    %71 = arith.addf %70, %69 : vector<16x324xf32>
    %72 = arith.mulf %34, %71 : vector<16x324xf32>
    %73 = arith.truncf %72 : vector<16x324xf32> to vector<16x324xbf16>
    %cst_33 = arith.constant dense<0.000000e+00> : vector<16x32xf32>
    %74 = tpu.matmul %73, %5, %cst_33 {dimension_numbers = #tpu.dot_dimension_numbers<[1], [0], [0], [1], [0, 0, 1, 1], [], []>} : vector<16x324xbf16>, vector<324x32xbf16>, vector<16x32xf32> -> vector<16x32xf32>
    %75 = vector.broadcast %6 : vector<1x32xf32> to vector<16x32xf32>
    %76 = arith.addf %74, %75 : vector<16x32xf32>
    %c0_34 = arith.constant 0 : index
    %c0_35 = arith.constant 0 : index
    %77 = vector.load %arg8[%c0_34, %c0_35] : memref<16x32xf32, #tpu.memory_space<vmem>>, vector<16x32xf32>
    tpu.vector_store %arg8[%c0_34, %c0_35], %76 {strides = array<i32>} : memref<16x32xf32, #tpu.memory_space<vmem>>, vector<16x32xf32>,
    return
  }
  func.func @transform_0(%arg0: i32) -> (i32, i32) {
    %c0_i32 = arith.constant 0 : i32
    %c0_i32_0 = arith.constant 0 : i32
    return %arg0, %c0_i32 : i32, i32
  }
  func.func @transform_1(%arg0: i32) -> (i32, i32) {
    %c0_i32 = arith.constant 0 : i32
    %c0_i32_0 = arith.constant 0 : i32
    %c0_i32_1 = arith.constant 0 : i32
    return %c0_i32, %c0_i32_0 : i32, i32
  }
  func.func @transform_2(%arg0: i32) -> (i32, i32) {
    %c0_i32 = arith.constant 0 : i32
    %c0_i32_0 = arith.constant 0 : i32
    %c0_i32_1 = arith.constant 0 : i32
    return %c0_i32, %c0_i32_0 : i32, i32
  }
  func.func @transform_3(%arg0: i32) -> (i32, i32) {
    %c0_i32 = arith.constant 0 : i32
    %c0_i32_0 = arith.constant 0 : i32
    %c0_i32_1 = arith.constant 0 : i32
    return %c0_i32, %c0_i32_0 : i32, i32
  }
  func.func @transform_4(%arg0: i32) -> (i32, i32) {
    %c0_i32 = arith.constant 0 : i32
    %c0_i32_0 = arith.constant 0 : i32
    %c0_i32_1 = arith.constant 0 : i32
    return %c0_i32, %c0_i32_0 : i32, i32
  }
  func.func @transform_5(%arg0: i32) -> (i32, i32) {
    %c0_i32 = arith.constant 0 : i32
    %c0_i32_0 = arith.constant 0 : i32
    %c0_i32_1 = arith.constant 0 : i32
    return %c0_i32, %c0_i32_0 : i32, i32
  }
  func.func @transform_6(%arg0: i32) -> (i32, i32) {
    %c0_i32 = arith.constant 0 : i32
    %c0_i32_0 = arith.constant 0 : i32
    %c0_i32_1 = arith.constant 0 : i32
    return %c0_i32, %c0_i32_0 : i32, i32
  }
  func.func @transform_7(%arg0: i32) -> (i32, i32) {
    %c0_i32 = arith.constant 0 : i32
    %c0_i32_0 = arith.constant 0 : i32
    return %arg0, %c0_i32 : i32, i32
  }
}

</mosaic_0001>

<llo_original>
// kernel: tpu_custom_call.1
$region0: #{tpu_custom_call.1}
  #allocation0 [shape = 'u32[]', space=smem, size = 0x4, offset = 0x4, fixed_abs, tag = 'smem constant byte address 0x4 - core index']
  #allocation1 [shape = 'u32[72,128]{1,0:T(1,128)}', space=vmem, size = 0x9000, scoped, tag = 'internal scratch']
  %s0 = inlined_call_operand.vmem [shape: f32[16,81], index: 0, kind: input, shape index: {}]
  %s1 = inlined_call_operand.vmem [shape: f32[1,81], index: 1, kind: input, shape index: {}]
  %s2 = inlined_call_operand.vmem [shape: f32[1,81], index: 2, kind: input, shape index: {}]
  %s3 = inlined_call_operand.vmem [shape: bf16[81,324], index: 3, kind: input, shape index: {}]
  %s4 = inlined_call_operand.vmem [shape: f32[1,324], index: 4, kind: input, shape index: {}]
  %s5 = inlined_call_operand.vmem [shape: bf16[324,32], index: 5, kind: input, shape index: {}]
  %s6 = inlined_call_operand.vmem [shape: f32[1,32], index: 6, kind: input, shape index: {}]
  %s7 = inlined_call_operand.hbm [shape: f32[16,32], index: 7, kind: output, shape index: {}]
  %s8 = sld [smem:[#allocation0]]
  $region38: #{tpu_custom_call.1} parent=0
    _
  %s10 = ssub.s32 1, %s8
  %s11 = scalar_select 0, %s10, %s8
  $region1: #{tpu_custom_call.1} parent=0
    #allocation2 [shape = 'u8[8192]{0}', space=vmem, size = 0x2000, scoped, tag = 'output window, operand 0, single buffered']
    #allocation3 [shape = 's32[1]{0}', space=sflag, size = 0x4, scoped, tag = 'scoped memory for tpu_custom_call.1']
    %12 = vsyncpa [#allocation3], 0
    // Predicated region
    $region2: #{tpu_custom_call.1} parent=1 // pred_check
      _
    $region3: #{tpu_custom_call.1} parent=1 // pred_check_branch
      %14 = sbr.rel (0) target = $region5
    $region4: #{tpu_custom_call.1} parent=1 // pred_region
      _
    $region5: #{tpu_custom_call.1} parent=1 // pred_fallthru
      _
    // Predicated region
    $region6: #{tpu_custom_call.1} parent=1 // pred_check
      _
    $region7: #{tpu_custom_call.1} parent=1 // pred_check_branch
      %16 = sbr.rel (0) target = $region9
    $region8: #{tpu_custom_call.1} parent=1 // pred_region
      _
    $region9: #{tpu_custom_call.1} parent=1 // pred_fallthru
      _
    // Predicated region
    $region10: #{tpu_custom_call.1} parent=1 // pred_check
      _
    $region11: #{tpu_custom_call.1} parent=1 // pred_check_branch
      %18 = sbr.rel (0) target = $region13
    $region12: #{tpu_custom_call.1} parent=1 // pred_region
      _
    $region13: #{tpu_custom_call.1} parent=1 // pred_fallthru
      _
    // Predicated region
    $region14: #{tpu_custom_call.1} parent=1 // pred_check
      _
    $region15: #{tpu_custom_call.1} parent=1 // pred_check_branch
      %20 = sbr.rel (0) target = $region17
    $region16: #{tpu_custom_call.1} parent=1 // pred_region
      _
    $region17: #{tpu_custom_call.1} parent=1 // pred_fallthru
      _
    // Predicated region
    $region18: #{tpu_custom_call.1} parent=1 // pred_check
      _
    $region19: #{tpu_custom_call.1} parent=1 // pred_check_branch
      %22 = sbr.rel (0) target = $region21
    $region20: #{tpu_custom_call.1} parent=1 // pred_region
      _
    $region21: #{tpu_custom_call.1} parent=1 // pred_fallthru
      _
    // Predicated region
    $region22: #{tpu_custom_call.1} parent=1 // pred_check
      _
    $region23: #{tpu_custom_call.1} parent=1 // pred_check_branch
      %24 = sbr.rel (0) target = $region25
    $region24: #{tpu_custom_call.1} parent=1 // pred_region
      _
    $region25: #{tpu_custom_call.1} parent=1 // pred_fallthru
      _
    // Predicated region
    $region26: #{tpu_custom_call.1} parent=1 // pred_check
      _
    $region27: #{tpu_custom_call.1} parent=1 // pred_check_branch
      %26 = sbr.rel (0) target = $region29
    $region28: #{tpu_custom_call.1} parent=1 // pred_region
      _
    $region29: #{tpu_custom_call.1} parent=1 // pred_fallthru
      _
    %v28 = vld [vmem:[%s0] sm:$0xff]
    %v29 = vld [vmem:[%s0 + $0x8] sm:$0xff]
    %v30 = vld [vmem:[%s1] sm:$0x1]
    %v31 = vld [vmem:[%s2] sm:$0x1]
    %v32 = vld [vmem:[%s3] sm:$0xff]
    %v33 = vld [vmem:[%s3 + $0x8] sm:$0xf]
    %v34 = vld [vmem:[%s3 + $0xc] sm:$0xff]
    %v35 = vld [vmem:[%s3 + $0x14] sm:$0xf]
    %v36 = vld [vmem:[%s3 + $0x18] sm:$0xff]
    %v37 = vld [vmem:[%s3 + $0x20] sm:$0xf]
    %v38 = vld [vmem:[%s3 + $0x24] sm:$0xff]
    %v39 = vld [vmem:[%s3 + $0x2c] sm:$0xf]
    %v40 = vld [vmem:[%s3 + $0x30] sm:$0xff]
    %v41 = vld [vmem:[%s3 + $0x38] sm:$0xf]
    %v42 = vld [vmem:[%s3 + $0x3c] sm:$0xff]
    %v43 = vld [vmem:[%s3 + $0x44] sm:$0xf]
    %v44 = vld [vmem:[%s3 + $0x48] sm:$0xff]
    %v45 = vld [vmem:[%s3 + $0x50] sm:$0xf]
    %v46 = vld [vmem:[%s3 + $0x54] sm:$0xff]
    %v47 = vld [vmem:[%s3 + $0x5c] sm:$0xf]
    %v48 = vld [vmem:[%s3 + $0x60] sm:$0xff]
    %v49 = vld [vmem:[%s3 + $0x68] sm:$0xf]
    %v50 = vld [vmem:[%s3 + $0x6c] sm:$0xff]
    %v51 = vld [vmem:[%s3 + $0x74] sm:$0xf]
    %v52 = vld [vmem:[%s3 + $0x78] sm:$0x11]
    %v53 = vld [vmem:[%s3 + $0x80] sm:$0x1]
    %v54 = vld [vmem:[%s4] sm:$0x7]
    %v55 = vld [vmem:[%s5] sm:$0xf]
    %v56 = vld [vmem:[%s5 + $0x4] sm:$0xf]
    %v57 = vld [vmem:[%s5 + $0x8] sm:$0xf]
    %v58 = vld [vmem:[%s5 + $0xc] sm:$0xf]
    %v59 = vld [vmem:[%s5 + $0x10] sm:$0xf]
    %v60 = vld [vmem:[%s5 + $0x14] sm:$0xf]
    %v61 = vld [vmem:[%s5 + $0x18] sm:$0xf]
    %v62 = vld [vmem:[%s5 + $0x1c] sm:$0xf]
    %v63 = vld [vmem:[%s5 + $0x20] sm:$0xf]
    %v64 = vld [vmem:[%s5 + $0x24] sm:$0xf]
    %v65 = vld [vmem:[%s5 + $0x28] sm:$0xf]
    %v66 = vld [vmem:[%s5 + $0x2c] sm:$0xf]
    %v67 = vld [vmem:[%s5 + $0x30] sm:$0xf]
    %v68 = vld [vmem:[%s5 + $0x34] sm:$0xf]
    %v69 = vld [vmem:[%s5 + $0x38] sm:$0xf]
    %v70 = vld [vmem:[%s5 + $0x3c] sm:$0xf]
    %v71 = vld [vmem:[%s5 + $0x40] sm:$0xf]
    %v72 = vld [vmem:[%s5 + $0x44] sm:$0xf]
    %v73 = vld [vmem:[%s5 + $0x48] sm:$0xf]
    %v74 = vld [vmem:[%s5 + $0x4c] sm:$0xf]
    %v75 = vld [vmem:[%s5 + $0x50] sm:$0xf]
    %v76 = vld [vmem:[%s5 + $0x54] sm:$0xf]
    %v77 = vld [vmem:[%s5 + $0x58] sm:$0xf]
    %v78 = vld [vmem:[%s5 + $0x5c] sm:$0xf]
    %v79 = vld [vmem:[%s5 + $0x60] sm:$0xf]
    %v80 = vld [vmem:[%s5 + $0x64] sm:$0xf]
    %v81 = vld [vmem:[%s5 + $0x68] sm:$0xf]
    %v82 = vld [vmem:[%s5 + $0x6c] sm:$0xf]
    %v83 = vld [vmem:[%s5 + $0x70] sm:$0xf]
    %v84 = vld [vmem:[%s5 + $0x74] sm:$0xf]
    %v85 = vld [vmem:[%s5 + $0x78] sm:$0xf]
    %v86 = vld [vmem:[%s5 + $0x7c] sm:$0xf]
    %v87 = vld [vmem:[%s5 + $0x80] sm:$0xf]
    %v88 = vld [vmem:[%s5 + $0x84] sm:$0xf]
    %v89 = vld [vmem:[%s5 + $0x88] sm:$0xf]
    %v90 = vld [vmem:[%s5 + $0x8c] sm:$0xf]
    %v91 = vld [vmem:[%s5 + $0x90] sm:$0xf]
    %v92 = vld [vmem:[%s5 + $0x94] sm:$0xf]
    %v93 = vld [vmem:[%s5 + $0x98] sm:$0xf]
    %v94 = vld [vmem:[%s5 + $0x9c] sm:$0xf]
    %v95 = vld [vmem:[%s5 + $0xa0] sm:$0x3]
    %v96 = vld [vmem:[%s6] sm:$0x1]
    %vm97 = vcmask 662528
    %v98 = vsel %vm97, %v28, 0.0
    %99 = vadd.xlane.f32.xlu0 %v98
    %v100 = vpop.xlane.xlu0 %99
    %v101 = vsel %vm97, %v29, 0.0
    %102 = vadd.xlane.f32.xlu0 %v101
    %v103 = vpop.xlane.xlu0 %102
    %v104 = vrcp.pop 81.0
    %v105 = vmul.f32 81.0, %v104
    %v106 = vsub.f32 1.0, %v105
    %v107 = vmul.f32 %v104, %v106
    %v108 = vadd.f32 %v104, %v107
    %vm109 = vweird.f32 %v104
    %v110 = vsel %vm109, %v104, %v108
    %v111 = vmul.f32 %v100, %v110
    %v112 = vmul.f32 %v103, %v110
    %v113 = vsub.f32 %v28, %v111
    %v114 = vsub.f32 %v29, %v112
    %v115 = vmul.f32 %v113, %v113
    %v116 = vmul.f32 %v114, %v114
    %v117 = vsel %vm97, %v115, 0.0
    %118 = vadd.xlane.f32.xlu0 %v117
    %v119 = vpop.xlane.xlu0 %118
    %v120 = vsel %vm97, %v116, 0.0
    %121 = vadd.xlane.f32.xlu0 %v120
    %v122 = vpop.xlane.xlu0 %121
    %v123 = vmul.f32 %v119, %v110
    %v124 = vmul.f32 %v122, %v110
    %v125 = vadd.f32 %v123, 1e-05
    %v126 = vadd.f32 %v124, 1e-05
    %v127 = vrsqrt.pop %v125
    %v128 = vmul.f32 %v127, %v125
    %v129 = vmul.f32 %v128, %v127
    %v130 = vmul.f32 0.5, %v129
    %v131 = vsub.f32 1.5, %v130
    %v132 = vmul.f32 %v127, %v131
    %vm133 = vweird.f32 %v125
    %vm134 = vweird.f32 %v127
    %vm135 = vmor %vm133, %vm134
    %v136 = vsel %vm135, %v127, %v132
    %v137 = vrsqrt.pop %v126
    %v138 = vmul.f32 %v137, %v126
    %v139 = vmul.f32 %v138, %v137
    %v140 = vmul.f32 0.5, %v139
    %v141 = vsub.f32 1.5, %v140
    %v142 = vmul.f32 %v137, %v141
    %vm143 = vweird.f32 %v126
    %vm144 = vweird.f32 %v137
    %vm145 = vmor %vm143, %vm144
    %v146 = vsel %vm145, %v137, %v142
    %v147 = vmul.f32 %v113, %v136
    %v148 = vmul.f32 %v114, %v146
    %v150 = vperm.slane %v30, 0
    %v152 = vmul.f32 %v147, %v150
    %v153 = vmul.f32 %v148, %v150
    %v155 = vperm.slane %v31, 0
    %v157 = vadd.f32 %v152, %v155
    %v158 = vadd.f32 %v153, %v155
    %v159 = vpack.c.bf16 %v158, %v157
    %v161 = vperm.slane %v54, 0
    %v162 = vperm.slane %v54, 1
    %v163 = vperm.slane %v54, 2
    %v189 = vunpack.c.l.b16 %v32
    %v190 = vunpack.c.h.b16 %v32
    %v191 = vunpack.c.l.b16 %v33
    %v192 = vunpack.c.l.b16 %v34
    %v193 = vunpack.c.h.b16 %v34
    %v194 = vunpack.c.l.b16 %v35
    %v195 = vunpack.c.l.b16 %v36
    %v196 = vunpack.c.h.b16 %v36
    %v197 = vunpack.c.l.b16 %v37
    %v198 = vunpack.c.l.b16 %v38
    %v199 = vunpack.c.h.b16 %v38
    %v200 = vunpack.c.l.b16 %v39
    %v201 = vunpack.c.l.b16 %v40
    %v202 = vunpack.c.h.b16 %v40
    %v203 = vunpack.c.l.b16 %v41
    %v204 = vunpack.c.l.b16 %v42
    %v205 = vunpack.c.h.b16 %v42
    %v206 = vunpack.c.l.b16 %v43
    %v207 = vunpack.c.l.b16 %v44
    %v208 = vunpack.c.h.b16 %v44
    %v209 = vunpack.c.l.b16 %v45
    %v210 = vunpack.c.l.b16 %v46
    %v211 = vunpack.c.h.b16 %v46
    %v212 = vunpack.c.l.b16 %v47
    %v213 = vunpack.c.l.b16 %v48
    %v214 = vunpack.c.h.b16 %v48
    %v215 = vunpack.c.l.b16 %v49
    %v216 = vunpack.c.l.b16 %v50
    %v217 = vunpack.c.h.b16 %v50
    %v218 = vunpack.c.l.b16 %v51
    %v219 = vunpack.c.l.b16 %v52
    %v220 = vunpack.c.h.b16 %v52
    %v221 = vunpack.c.l.b16 %v53
    %v222 = vpack.c.b16 %v192, %v189
    %v223 = vpack.c.b16 %v193, %v190
    %v224 = vpack.c.b16 %v194, %v191
    %v225 = vpack.c.b16 %v198, %v195
    %v226 = vpack.c.b16 %v199, %v196
    %v227 = vpack.c.b16 %v200, %v197
    %v228 = vpack.c.b16 %v204, %v201
    %v229 = vpack.c.b16 %v205, %v202
    %v230 = vpack.c.b16 %v206, %v203
    %v231 = vpack.c.b16 %v210, %v207
    %v232 = vpack.c.b16 %v211, %v208
    %v233 = vpack.c.b16 %v212, %v209
    %v234 = vpack.c.b16 %v216, %v213
    %v235 = vpack.c.b16 %v217, %v214
    %v236 = vpack.c.b16 %v218, %v215
    %v237 = vpack.c.b16 %v219, %v219
    %v238 = vpack.c.b16 %v220, %v220
    %v239 = vpack.c.b16 %v221, %v221
    %v256 = vsel %vm97, %v159, 0
    %vm258 = vcmask 1040384
    %v259 = vsel 0, 4294967295, 65535
    %v260 = vsel %vm258, %v259, 0
    %v262 = vand.u32 %v237, %v260
    %v265 = vand.u32 %v238, %v260
    %v268 = vand.u32 %v239, %v260
    %270 = vmatpush.bf16.msra.mxu0 0
    %271 = vmatpush.bf16.msra.mxu0 0
    %272 = vmatpush.bf16.msra.mxu0 %v262
    %273 = vmatpush.bf16.msra.mxu0 %v234
    %274 = vmatpush.bf16.msra.mxu0 %v231
    %275 = vmatpush.bf16.msra.mxu0 %v228
    %276 = vmatpush.bf16.msra.mxu0 %v225
    %277 = vmatpush.bf16.msra.mxu0 %v222
    %278 = vmatmul.bf16.gmra.mxu0 %v256
    %v279 = vpop.f32.mrf.mxu0
    %v280 = vadd.f32 %v161, %v279
    %v281 = vpop.f32.mrf.mxu0
    %v282 = vadd.f32 %v161, %v281
    %283 = vdwg.mxu0
    %284 = vmatpush.bf16.msra.mxu0 0
    %285 = vmatpush.bf16.msra.mxu0 0
    %286 = vmatpush.bf16.msra.mxu0 %v265
    %287 = vmatpush.bf16.msra.mxu0 %v235
    %288 = vmatpush.bf16.msra.mxu0 %v232
    %289 = vmatpush.bf16.msra.mxu0 %v229
    %290 = vmatpush.bf16.msra.mxu0 %v226
    %291 = vmatpush.bf16.msra.mxu0 %v223
    %292 = vmatmul.bf16.gmra.mxu0 %v256
    %v293 = vpop.f32.mrf.mxu0
    %v294 = vadd.f32 %v162, %v293
    %v295 = vpop.f32.mrf.mxu0
    %v296 = vadd.f32 %v162, %v295
    %297 = vdwg.mxu0
    %298 = vmatpush.bf16.msra.mxu0 0
    %299 = vmatpush.bf16.msra.mxu0 0
    %300 = vmatpush.bf16.msra.mxu0 %v268
    %301 = vmatpush.bf16.msra.mxu0 %v236
    %302 = vmatpush.bf16.msra.mxu0 %v233
    %303 = vmatpush.bf16.msra.mxu0 %v230
    %304 = vmatpush.bf16.msra.mxu0 %v227
    %305 = vmatpush.bf16.msra.mxu0 %v224
    %306 = vmatmul.bf16.gmra.mxu0 %v256
    %v307 = vpop.f32.mrf.mxu0
    %v308 = vadd.f32 %v163, %v307
    %v309 = vpop.f32.mrf.mxu0
    %v310 = vadd.f32 %v163, %v309
    %311 = vdwg.mxu0
    %v312 = vmul.f32 %v280, 0.5
    %v313 = vmul.f32 %v294, 0.5
    %v314 = vmul.f32 %v308, 0.5
    %v315 = vmul.f32 %v282, 0.5
    %v316 = vmul.f32 %v296, 0.5
    %v317 = vmul.f32 %v310, 0.5
    %v318 = vmul.f32 %v280, 0.70710677
    %v319 = vmul.f32 %v294, 0.70710677
    %v320 = vmul.f32 %v308, 0.70710677
    %v321 = vmul.f32 %v282, 0.70710677
    %v322 = vmul.f32 %v296, 0.70710677
    %v323 = vmul.f32 %v310, 0.70710677
    %v324 = vand.u32 2147483647, %v318
    %v325 = vand.u32 2147483647, %v319
    %v326 = vand.u32 2147483647, %v320
    %v327 = vand.u32 2147483647, %v321
    %v328 = vand.u32 2147483647, %v322
    %v329 = vand.u32 2147483647, %v323
    %v330 = vmul.f32 %v324, 0.3275911
    %v331 = vmul.f32 %v325, 0.3275911
    %v332 = vmul.f32 %v326, 0.3275911
    %v333 = vmul.f32 %v327, 0.3275911
    %v334 = vmul.f32 %v328, 0.3275911
    %v335 = vmul.f32 %v329, 0.3275911
    %v336 = vadd.f32 %v330, 1.0
    %v337 = vadd.f32 %v331, 1.0
    %v338 = vadd.f32 %v332, 1.0
    %v339 = vadd.f32 %v333, 1.0
    %v340 = vadd.f32 %v334, 1.0
    %v341 = vadd.f32 %v335, 1.0
    %v342 = vrcp.pop %v336
    %v343 = vmul.f32 %v336, %v342
    %v344 = vsub.f32 1.0, %v343
    %v345 = vmul.f32 %v342, %v344
    %v346 = vadd.f32 %v342, %v345
    %vm347 = vweird.f32 %v336
    %vm348 = vweird.f32 %v342
    %vm349 = vmor %vm347, %vm348
    %v350 = vsel %vm349, %v342, %v346
    %v351 = vand.u32 2147483647, %v336
    %vm352 = vcmp.eq.f32.partialorder %v351, 8.507059e+37
    %v353 = vand.u32 %v336, 2147483648
    %v354 = vor.u32 1.1754944e-38, %v353
    %v355 = vsel %vm352, %v354, %v350
    %v356 = vmul.f32 1.0, %v355
    %v357 = vrcp.pop %v337
    %v358 = vmul.f32 %v337, %v357
    %v359 = vsub.f32 1.0, %v358
    %v360 = vmul.f32 %v357, %v359
    %v361 = vadd.f32 %v357, %v360
    %vm362 = vweird.f32 %v337
    %vm363 = vweird.f32 %v357
    %vm364 = vmor %vm362, %vm363
    %v365 = vsel %vm364, %v357, %v361
    %v366 = vand.u32 2147483647, %v337
    %vm367 = vcmp.eq.f32.partialorder %v366, 8.507059e+37
    %v368 = vand.u32 %v337, 2147483648
    %v369 = vor.u32 1.1754944e-38, %v368
    %v370 = vsel %vm367, %v369, %v365
    %v371 = vmul.f32 1.0, %v370
    %v372 = vrcp.pop %v338
    %v373 = vmul.f32 %v338, %v372
    %v374 = vsub.f32 1.0, %v373
    %v375 = vmul.f32 %v372, %v374
    %v376 = vadd.f32 %v372, %v375
    %vm377 = vweird.f32 %v338
    %vm378 = vweird.f32 %v372
    %vm379 = vmor %vm377, %vm378
    %v380 = vsel %vm379, %v372, %v376
    %v381 = vand.u32 2147483647, %v338
    %vm382 = vcmp.eq.f32.partialorder %v381, 8.507059e+37
    %v383 = vand.u32 %v338, 2147483648
    %v384 = vor.u32 1.1754944e-38, %v383
    %v385 = vsel %vm382, %v384, %v380
    %v386 = vmul.f32 1.0, %v385
    %v387 = vrcp.pop %v339
    %v388 = vmul.f32 %v339, %v387
    %v389 = vsub.f32 1.0, %v388
    %v390 = vmul.f32 %v387, %v389
    %v391 = vadd.f32 %v387, %v390
    %vm392 = vweird.f32 %v339
    %vm393 = vweird.f32 %v387
    %vm394 = vmor %vm392, %vm393
    %v395 = vsel %vm394, %v387, %v391
    %v396 = vand.u32 2147483647, %v339
    %vm397 = vcmp.eq.f32.partialorder %v396, 8.507059e+37
    %v398 = vand.u32 %v339, 2147483648
    %v399 = vor.u32 1.1754944e-38, %v398
    %v400 = vsel %vm397, %v399, %v395
    %v401 = vmul.f32 1.0, %v400
    %v402 = vrcp.pop %v340
    %v403 = vmul.f32 %v340, %v402
    %v404 = vsub.f32 1.0, %v403
    %v405 = vmul.f32 %v402, %v404
    %v406 = vadd.f32 %v402, %v405
    %vm407 = vweird.f32 %v340
    %vm408 = vweird.f32 %v402
    %vm409 = vmor %vm407, %vm408
    %v410 = vsel %vm409, %v402, %v406
    %v411 = vand.u32 2147483647, %v340
    %vm412 = vcmp.eq.f32.partialorder %v411, 8.507059e+37
    %v413 = vand.u32 %v340, 2147483648
    %v414 = vor.u32 1.1754944e-38, %v413
    %v415 = vsel %vm412, %v414, %v410
    %v416 = vmul.f32 1.0, %v415
    %v417 = vrcp.pop %v341
    %v418 = vmul.f32 %v341, %v417
    %v419 = vsub.f32 1.0, %v418
    %v420 = vmul.f32 %v417, %v419
    %v421 = vadd.f32 %v417, %v420
    %vm422 = vweird.f32 %v341
    %vm423 = vweird.f32 %v417
    %vm424 = vmor %vm422, %vm423
    %v425 = vsel %vm424, %v417, %v421
    %v426 = vand.u32 2147483647, %v341
    %vm427 = vcmp.eq.f32.partialorder %v426, 8.507059e+37
    %v428 = vand.u32 %v341, 2147483648
    %v429 = vor.u32 1.1754944e-38, %v428
    %v430 = vsel %vm427, %v429, %v425
    %v431 = vmul.f32 1.0, %v430
    %v432 = vmul.f32 %v356, 1.0614054
    %v433 = vmul.f32 %v371, 1.0614054
    %v434 = vmul.f32 %v386, 1.0614054
    %v435 = vmul.f32 %v401, 1.0614054
    %v436 = vmul.f32 %v416, 1.0614054
    %v437 = vmul.f32 %v431, 1.0614054
    %v438 = vadd.f32 %v432, -1.4531521
    %v439 = vadd.f32 %v433, -1.4531521
    %v440 = vadd.f32 %v434, -1.4531521
    %v441 = vadd.f32 %v435, -1.4531521
    %v442 = vadd.f32 %v436, -1.4531521
    %v443 = vadd.f32 %v437, -1.4531521
    %v444 = vmul.f32 %v438, %v356
    %v445 = vmul.f32 %v439, %v371
    %v446 = vmul.f32 %v440, %v386
    %v447 = vmul.f32 %v441, %v401
    %v448 = vmul.f32 %v442, %v416
    %v449 = vmul.f32 %v443, %v431
    %v450 = vadd.f32 %v444, 1.4214138
    %v451 = vadd.f32 %v445, 1.4214138
    %v452 = vadd.f32 %v446, 1.4214138
    %v453 = vadd.f32 %v447, 1.4214138
    %v454 = vadd.f32 %v448, 1.4214138
    %v455 = vadd.f32 %v449, 1.4214138
    %v456 = vmul.f32 %v450, %v356
    %v457 = vmul.f32 %v451, %v371
    %v458 = vmul.f32 %v452, %v386
    %v459 = vmul.f32 %v453, %v401
    %v460 = vmul.f32 %v454, %v416
    %v461 = vmul.f32 %v455, %v431
    %v462 = vadd.f32 %v456, -0.28449672
    %v463 = vadd.f32 %v457, -0.28449672
    %v464 = vadd.f32 %v458, -0.28449672
    %v465 = vadd.f32 %v459, -0.28449672
    %v466 = vadd.f32 %v460, -0.28449672
    %v467 = vadd.f32 %v461, -0.28449672
    %v468 = vmul.f32 %v462, %v356
    %v469 = vmul.f32 %v463, %v371
    %v470 = vmul.f32 %v464, %v386
    %v471 = vmul.f32 %v465, %v401
    %v472 = vmul.f32 %v466, %v416
    %v473 = vmul.f32 %v467, %v431
    %v474 = vadd.f32 %v468, 0.2548296
    %v475 = vadd.f32 %v469, 0.2548296
    %v476 = vadd.f32 %v470, 0.2548296
    %v477 = vadd.f32 %v471, 0.2548296
    %v478 = vadd.f32 %v472, 0.2548296
    %v479 = vadd.f32 %v473, 0.2548296
    %v480 = vmul.f32 %v474, %v356
    %v481 = vmul.f32 %v475, %v371
    %v482 = vmul.f32 %v476, %v386
    %v483 = vmul.f32 %v477, %v401
    %v484 = vmul.f32 %v478, %v416
    %v485 = vmul.f32 %v479, %v431
    %v486 = vsub.f32 0.0, %v324
    %v487 = vsub.f32 0.0, %v325
    %v488 = vsub.f32 0.0, %v326
    %v489 = vsub.f32 0.0, %v327
    %v490 = vsub.f32 0.0, %v328
    %v491 = vsub.f32 0.0, %v329
    %v492 = vmul.f32 %v486, %v324
    %v493 = vmul.f32 %v487, %v325
    %v494 = vmul.f32 %v488, %v326
    %v495 = vmul.f32 %v489, %v327
    %v496 = vmul.f32 %v490, %v328
    %v497 = vmul.f32 %v491, %v329
    %v498 = vmul.f32 %v492, 1.442695
    %v499 = vpow.pop %v498
    %v500 = vmul.f32 %v493, 1.442695
    %v501 = vpow.pop %v500
    %v502 = vmul.f32 %v494, 1.442695
    %v503 = vpow.pop %v502
    %v504 = vmul.f32 %v495, 1.442695
    %v505 = vpow.pop %v504
    %v506 = vmul.f32 %v496, 1.442695
    %v507 = vpow.pop %v506
    %v508 = vmul.f32 %v497, 1.442695
    %v509 = vpow.pop %v508
    %v510 = vmul.f32 %v480, %v499
    %v511 = vmul.f32 %v481, %v501
    %v512 = vmul.f32 %v482, %v503
    %v513 = vmul.f32 %v483, %v505
    %v514 = vmul.f32 %v484, %v507
    %v515 = vmul.f32 %v485, %v509
    %v516 = vsub.f32 1.0, %v510
    %v517 = vsub.f32 1.0, %v511
    %v518 = vsub.f32 1.0, %v512
    %v519 = vsub.f32 1.0, %v513
    %v520 = vsub.f32 1.0, %v514
    %v521 = vsub.f32 1.0, %v515
    %vm522 = vcmp.lt.f32.partialorder %v318, 0.0
    %vm523 = vcmp.lt.f32.partialorder %v319, 0.0
    %vm524 = vcmp.lt.f32.partialorder %v320, 0.0
    %vm525 = vcmp.lt.f32.partialorder %v321, 0.0
    %vm526 = vcmp.lt.f32.partialorder %v322, 0.0
    %vm527 = vcmp.lt.f32.partialorder %v323, 0.0
    %v528 = vsub.f32 0.0, %v516
    %v529 = vsub.f32 0.0, %v517
    %v530 = vsub.f32 0.0, %v518
    %v531 = vsub.f32 0.0, %v519
    %v532 = vsub.f32 0.0, %v520
    %v533 = vsub.f32 0.0, %v521
    %v534 = vsel %vm522, %v528, %v516
    %v535 = vsel %vm523, %v529, %v517
    %v536 = vsel %vm524, %v530, %v518
    %v537 = vsel %vm525, %v531, %v519
    %v538 = vsel %vm526, %v532, %v520
    %v539 = vsel %vm527, %v533, %v521
    %v540 = vadd.f32 %v534, 1.0
    %v541 = vadd.f32 %v535, 1.0
    %v542 = vadd.f32 %v536, 1.0
    %v543 = vadd.f32 %v537, 1.0
    %v544 = vadd.f32 %v538, 1.0
    %v545 = vadd.f32 %v539, 1.0
    %v546 = vmul.f32 %v312, %v540
    %v547 = vmul.f32 %v313, %v541
    %v548 = vmul.f32 %v314, %v542
    %v549 = vmul.f32 %v315, %v543
    %v550 = vmul.f32 %v316, %v544
    %v551 = vmul.f32 %v317, %v545
    %v552 = vpack.c.bf16 %v549, %v546
    %v553 = vpack.c.bf16 %v550, %v547
    %v554 = vpack.c.bf16 %v551, %v548
    %v556 = vperm.slane %v96, 0
    %v599 = vunpack.c.l.b16 %v55
    %v600 = vunpack.c.l.b16 %v56
    %v601 = vunpack.c.l.b16 %v57
    %v602 = vunpack.c.l.b16 %v58
    %v603 = vunpack.c.l.b16 %v59
    %v604 = vunpack.c.l.b16 %v60
    %v605 = vunpack.c.l.b16 %v61
    %v606 = vunpack.c.l.b16 %v62
    %v607 = vunpack.c.l.b16 %v63
    %v608 = vunpack.c.l.b16 %v64
    %v609 = vunpack.c.l.b16 %v65
    %v610 = vunpack.c.l.b16 %v66
    %v611 = vunpack.c.l.b16 %v67
    %v612 = vunpack.c.l.b16 %v68
    %v613 = vunpack.c.l.b16 %v69
    %v614 = vunpack.c.l.b16 %v70
    %v615 = vunpack.c.l.b16 %v71
    %v616 = vunpack.c.l.b16 %v72
    %v617 = vunpack.c.l.b16 %v73
    %v618 = vunpack.c.l.b16 %v74
    %v619 = vunpack.c.l.b16 %v75
    %v620 = vunpack.c.l.b16 %v76
    %v621 = vunpack.c.l.b16 %v77
    %v622 = vunpack.c.l.b16 %v78
    %v623 = vunpack.c.l.b16 %v79
    %v624 = vunpack.c.l.b16 %v80
    %v625 = vunpack.c.l.b16 %v81
    %v626 = vunpack.c.l.b16 %v82
    %v627 = vunpack.c.l.b16 %v83
    %v628 = vunpack.c.l.b16 %v84
    %v629 = vunpack.c.l.b16 %v85
    %v630 = vunpack.c.l.b16 %v86
    %v631 = vunpack.c.l.b16 %v87
    %v632 = vunpack.c.l.b16 %v88
    %v633 = vunpack.c.l.b16 %v89
    %v634 = vunpack.c.l.b16 %v90
    %v635 = vunpack.c.l.b16 %v91
    %v636 = vunpack.c.l.b16 %v92
    %v637 = vunpack.c.l.b16 %v93
    %v638 = vunpack.c.l.b16 %v94
    %v639 = vunpack.c.l.b16 %v95
    %v640 = vpack.c.b16 %v600, %v599
    %v641 = vpack.c.b16 %v602, %v601
    %v642 = vpack.c.b16 %v604, %v603
    %v643 = vpack.c.b16 %v606, %v605
    %v644 = vpack.c.b16 %v608, %v607
    %v645 = vpack.c.b16 %v610, %v609
    %v646 = vpack.c.b16 %v612, %v611
    %v647 = vpack.c.b16 %v614, %v613
    %v648 = vpack.c.b16 %v616, %v615
    %v649 = vpack.c.b16 %v618, %v617
    %v650 = vpack.c.b16 %v620, %v619
    %v651 = vpack.c.b16 %v622, %v621
    %v652 = vpack.c.b16 %v624, %v623
    %v653 = vpack.c.b16 %v626, %v625
    %v654 = vpack.c.b16 %v628, %v627
    %v655 = vpack.c.b16 %v630, %v629
    %v656 = vpack.c.b16 %v632, %v631
    %v657 = vpack.c.b16 %v634, %v633
    %v658 = vpack.c.b16 %v636, %v635
    %v659 = vpack.c.b16 %v638, %v637
    %v660 = vpack.c.b16 %v639, %v639
    %vm681 = vcmask 556032
    %v683 = vsel %vm681, %v554, 0
    %vm685 = vcmask 1041408
    %v687 = vsel %vm685, %v660, 0
    %689 = vmatpush.bf16.msra.mxu0 %v647
    %690 = vmatpush.bf16.msra.mxu0 %v646
    %691 = vmatpush.bf16.msra.mxu0 %v645
    %692 = vmatpush.bf16.msra.mxu0 %v644
    %693 = vmatpush.bf16.msra.mxu0 %v643
    %694 = vmatpush.bf16.msra.mxu0 %v642
    %695 = vmatpush.bf16.msra.mxu0 %v641
    %696 = vmatpush.bf16.msra.mxu0 %v640
    %697 = vmatmul.bf16.gmra.mxu0 %v552
    %v698 = vpop.f32.mrf.mxu0
    %v699 = vadd.f32 %v556, %v698
    %v700 = vpop.f32.mrf.mxu0
    %v701 = vadd.f32 %v556, %v700
    %702 = vdwg.mxu0
    %703 = vmatpush.bf16.msra.mxu0 %v655
    %704 = vmatpush.bf16.msra.mxu0 %v654
    %705 = vmatpush.bf16.msra.mxu0 %v653
    %706 = vmatpush.bf16.msra.mxu0 %v652
    %707 = vmatpush.bf16.msra.mxu0 %v651
    %708 = vmatpush.bf16.msra.mxu0 %v650
    %709 = vmatpush.bf16.msra.mxu0 %v649
    %710 = vmatpush.bf16.msra.mxu0 %v648
    %711 = vmatmul.bf16.gmra.mxu0 %v553
    %v712 = vpop.f32.mrf.mxu0
    %v713 = vadd.f32 %v699, %v712
    %v714 = vpop.f32.mrf.mxu0
    %v715 = vadd.f32 %v701, %v714
    %716 = vdwg.mxu0
    %717 = vmatpush.bf16.msra.mxu0 0
    %718 = vmatpush.bf16.msra.mxu0 0
    %719 = vmatpush.bf16.msra.mxu0 0
    %720 = vmatpush.bf16.msra.mxu0 %v687
    %721 = vmatpush.bf16.msra.mxu0 %v659
    %722 = vmatpush.bf16.msra.mxu0 %v658
    %723 = vmatpush.bf16.msra.mxu0 %v657
    %724 = vmatpush.bf16.msra.mxu0 %v656
    %725 = vmatmul.bf16.gmra.mxu0 %v683
    %v726 = vpop.f32.mrf.mxu0
    %v727 = vadd.f32 %v713, %v726
    %v728 = vpop.f32.mrf.mxu0
    %v729 = vadd.f32 %v715, %v728
    %730 = vdwg.mxu0
    %vm731 = vcmask 261120
    %732 = vst.msk [vmem:[#allocation2] sm:$0xff] %vm731, %v727
    %733 = vst.msk [vmem:[#allocation2 + $0x8] sm:$0xff] %vm731, %v729
    // Predicated region
    $region30: #{tpu_custom_call.1} parent=1 // pred_check
      _
    $region31: #{tpu_custom_call.1} parent=1 // pred_check_branch
      %735 = sbr.rel (0) target = $region33
    $region32: #{tpu_custom_call.1} parent=1 // pred_region
      %737 = vsyncadd [#allocation3], 0
      %s738 = sshll.u32 [#allocation2], 4
      %s739 = int_to_ptr.vmem [resolvable:$true] %s738
      %s740 = sshll.u32 %s7, 4
      %s741 = int_to_ptr.hbm [resolvable:$true] %s740
      %746 = dma.vmem_to_hbm [thread:$0]  %s739, 256, %s741, [#allocation3], 128, 128, 8
    $region33: #{tpu_custom_call.1} parent=1 // pred_fallthru
      _
    // Predicated region
    $region34: #{tpu_custom_call.1} parent=1 // pred_check
      _
    $region35: #{tpu_custom_call.1} parent=1 // pred_check_branch
      %748 = sbr.rel (0) target = $region37
    $region36: #{tpu_custom_call.1} parent=1 // pred_region
      %750 = dma.done [#allocation3], 256
    $region37: #{tpu_custom_call.1} parent=1 // pred_fallthru
      _
    %751 = vsyncpa [#allocation3], 1

</llo_original>
